<compile_context>
chip_gen: v5e
topology: v5e:2x2
jax: 0.10.0
libtpu: 0.0.40
codegen_flags: <defaults>
</compile_context>

<pallas_src>
import functools

import jax
import jax.numpy as jnp
from jax.experimental import pallas as pl
from jax.experimental.pallas import tpu as pltpu


# ----------------------------------------------------------------------------
# helpers
# ----------------------------------------------------------------------------

def _round_up(x, m):
    return (x + m - 1) // m * m


# Matmul tile targets (fit comfortably in scoped VMEM on v5e/v6e/v7x with
# double-buffered bf16 inputs + one f32 accumulator tile).
_TM, _TN, _TK = 256, 256, 512
_ROW_TILE = 512  # row tile for elementwise kernels


# ----------------------------------------------------------------------------
# Tiled linear kernel: Y = act(X @ W + b), bf16 MXU inputs, f32 accumulation
# ----------------------------------------------------------------------------

def _linear_kernel(x_ref, w_ref, b_ref, o_ref, acc_ref, *, activation):
    @pl.when(pl.program_id(2) == 0)
    def _():
        acc_ref[...] = jnp.zeros_like(acc_ref)

    acc_ref[...] += jnp.dot(x_ref[...], w_ref[...],
                            preferred_element_type=jnp.float32)

    @pl.when(pl.program_id(2) == pl.num_programs(2) - 1)
    def _():
        y = acc_ref[...] + b_ref[...].astype(jnp.float32)
        if activation == "gelu":
            # gelu_pytorch_tanh (SigLIP activation), fused into the epilogue.
            c = 0.7978845608028654  # sqrt(2/pi)
            y = 0.5 * y * (1.0 + jnp.tanh(c * (y + 0.044715 * y * y * y)))
        o_ref[...] = y.astype(o_ref.dtype)


def linear(x, w, b, activation=None, out_dtype=jnp.bfloat16):
    """x: (M, K), w: (K, N), b: (N,) -> (M, N) in out_dtype."""
    M, K = x.shape
    N = w.shape[1]
    tm = min(_TM, _round_up(M, 8))
    tn = min(_TN, _round_up(N, 128))
    tk = min(_TK, _round_up(K, 128))
    Mp, Np, Kp = _round_up(M, tm), _round_up(N, tn), _round_up(K, tk)

    xb = x.astype(jnp.bfloat16)
    wb = w.astype(jnp.bfloat16)
    bb = b.reshape(1, N).astype(jnp.float32)
    if (Mp, Kp) != (M, K):
        xb = jnp.pad(xb, ((0, Mp - M), (0, Kp - K)))
    if (Kp, Np) != (K, N):
        wb = jnp.pad(wb, ((0, Kp - K), (0, Np - N)))
    if Np != N:
        bb = jnp.pad(bb, ((0, 0), (0, Np - N)))

    out = pl.pallas_call(
        functools.partial(_linear_kernel, activation=activation),
        grid=(Mp // tm, Np // tn, Kp // tk),
        in_specs=[
            pl.BlockSpec((tm, tk), lambda i, j, k: (i, k)),
            pl.BlockSpec((tk, tn), lambda i, j, k: (k, j)),
            pl.BlockSpec((1, tn), lambda i, j, k: (0, j)),
        ],
        out_specs=pl.BlockSpec((tm, tn), lambda i, j, k: (i, j)),
        out_shape=jax.ShapeDtypeStruct((Mp, Np), out_dtype),
        scratch_shapes=[pltpu.VMEM((tm, tn), jnp.float32)],
        compiler_params=pltpu.CompilerParams(
            dimension_semantics=("parallel", "parallel", "arbitrary")),
    )(xb, wb, bb)
    if (Mp, Np) != (M, N):
        out = out[:M, :N]
    return out


# ----------------------------------------------------------------------------
# LayerNorm (plain) and fused residual-add + LayerNorm, row-tiled
# ----------------------------------------------------------------------------

def _ln_kernel(x_ref, g_ref, b_ref, o_ref, *, eps):
    x = x_ref[...].astype(jnp.float32)
    mu = jnp.mean(x, axis=-1, keepdims=True)
    var = jnp.mean((x - mu) * (x - mu), axis=-1, keepdims=True)
    y = (x - mu) * jax.lax.rsqrt(var + eps) * g_ref[...].astype(jnp.float32) \
        + b_ref[...].astype(jnp.float32)
    o_ref[...] = y.astype(o_ref.dtype)


def layernorm(x, p, eps=1e-6, out_dtype=jnp.bfloat16):
    """x: (M, D); p['g'], p['b']: (1, D)."""
    M, D = x.shape
    tm = min(_ROW_TILE, _round_up(M, 8))
    Mp = _round_up(M, tm)
    xp = jnp.pad(x, ((0, Mp - M), (0, 0))) if Mp != M else x
    out = pl.pallas_call(
        functools.partial(_ln_kernel, eps=eps),
        grid=(Mp // tm,),
        in_specs=[
            pl.BlockSpec((tm, D), lambda i: (i, 0)),
            pl.BlockSpec((1, D), lambda i: (0, 0)),
            pl.BlockSpec((1, D), lambda i: (0, 0)),
        ],
        out_specs=pl.BlockSpec((tm, D), lambda i: (i, 0)),
        out_shape=jax.ShapeDtypeStruct((Mp, D), out_dtype),
        compiler_params=pltpu.CompilerParams(dimension_semantics=("parallel",)),
    )(xp, p['g'], p['b'])
    return out[:M] if Mp != M else out


def _add_ln_kernel(x_ref, h_ref, g_ref, b_ref, s_ref, y_ref, *, eps):
    s = x_ref[...].astype(jnp.float32) + h_ref[...].astype(jnp.float32)
    mu = jnp.mean(s, axis=-1, keepdims=True)
    var = jnp.mean((s - mu) * (s - mu), axis=-1, keepdims=True)
    y = (s - mu) * jax.lax.rsqrt(var + eps) * g_ref[...].astype(jnp.float32) \
        + b_ref[...].astype(jnp.float32)
    s_ref[...] = s.astype(s_ref.dtype)
    y_ref[...] = y.astype(y_ref.dtype)


def add_layernorm(x, h, p, eps=1e-6):
    """Fused: s = x + h ; y = LayerNorm(s).  x/h: (M, D) -> (s f32, y bf16)."""
    M, D = x.shape
    tm = min(_ROW_TILE, _round_up(M, 8))
    Mp = _round_up(M, tm)
    xp = jnp.pad(x, ((0, Mp - M), (0, 0))) if Mp != M else x
    hp = jnp.pad(h, ((0, Mp - M), (0, 0))) if Mp != M else h
    s, y = pl.pallas_call(
        functools.partial(_add_ln_kernel, eps=eps),
        grid=(Mp // tm,),
        in_specs=[
            pl.BlockSpec((tm, D), lambda i: (i, 0)),
            pl.BlockSpec((tm, D), lambda i: (i, 0)),
            pl.BlockSpec((1, D), lambda i: (0, 0)),
            pl.BlockSpec((1, D), lambda i: (0, 0)),
        ],
        out_specs=(pl.BlockSpec((tm, D), lambda i: (i, 0)),
                   pl.BlockSpec((tm, D), lambda i: (i, 0))),
        out_shape=(jax.ShapeDtypeStruct((Mp, D), jnp.float32),
                   jax.ShapeDtypeStruct((Mp, D), jnp.bfloat16)),
        compiler_params=pltpu.CompilerParams(dimension_semantics=("parallel",)),
    )(xp, hp, p['g'], p['b'])
    if Mp != M:
        s, y = s[:M], y[:M]
    return s, y


# ----------------------------------------------------------------------------
# L2 normalize (F.normalize(dim=-1)), row-tiled
# ----------------------------------------------------------------------------

def _l2norm_kernel(x_ref, o_ref):
    x = x_ref[...].astype(jnp.float32)
    inv = jax.lax.rsqrt(jnp.sum(x * x, axis=-1, keepdims=True) + 1e-24)
    o_ref[...] = (x * inv).astype(o_ref.dtype)


def l2norm(x):
    M, D = x.shape
    tm = min(_ROW_TILE, _round_up(M, 8))
    Mp = _round_up(M, tm)
    xp = jnp.pad(x, ((0, Mp - M), (0, 0))) if Mp != M else x
    out = pl.pallas_call(
        _l2norm_kernel,
        grid=(Mp // tm,),
        in_specs=[pl.BlockSpec((tm, D), lambda i: (i, 0))],
        out_specs=pl.BlockSpec((tm, D), lambda i: (i, 0)),
        out_shape=jax.ShapeDtypeStruct((Mp, D), jnp.float32),
        compiler_params=pltpu.CompilerParams(dimension_semantics=("parallel",)),
    )(xp)
    return out[:M] if Mp != M else out


# ----------------------------------------------------------------------------
# Attention kernel: blocked over (B*H, Sq tiles); in-kernel mask bias
# ----------------------------------------------------------------------------

def _attn_kernel(q_ref, k_ref, v_ref, o_ref, *, scale):
    q = q_ref[0]                               # (tq, hd) bf16
    k = k_ref[0]                               # (Sk, hd) bf16
    s = jax.lax.dot_general(q, k, (((1,), (1,)), ((), ())),
                            preferred_element_type=jnp.float32) * scale
    s = s - jnp.max(s, axis=-1, keepdims=True)
    p = jnp.exp(s)
    p = p * pl.reciprocal(jnp.sum(p, axis=-1, keepdims=True), approx=True)
    o = jnp.dot(p.astype(v_ref.dtype), v_ref[0],
                preferred_element_type=jnp.float32)
    o_ref[0] = o.astype(o_ref.dtype)


def _attn_mask_kernel(mask_ref, q_ref, k_ref, v_ref, o_ref, *, scale):
    bias = jnp.where(mask_ref[...] > 0.0, 0.0, -1e9).astype(jnp.float32)  # (1, Sk)
    q = q_ref[0]
    k = k_ref[0]
    s = jax.lax.dot_general(q, k, (((1,), (1,)), ((), ())),
                            preferred_element_type=jnp.float32) * scale
    s = s + bias
    s = s - jnp.max(s, axis=-1, keepdims=True)
    p = jnp.exp(s)
    p = p * pl.reciprocal(jnp.sum(p, axis=-1, keepdims=True), approx=True)
    o = jnp.dot(p.astype(v_ref.dtype), v_ref[0],
                preferred_element_type=jnp.float32)
    o_ref[0] = o.astype(o_ref.dtype)


def attention(q, k, v, mask, scale, num_heads):
    """q: (B*H, Sq, hd), k/v: (B*H, Sk, hd), mask: optional (B, Sk)."""
    BH, Sq, hd = q.shape
    Sk = k.shape[1]
    if Sq <= 256:
        tq = Sq
    elif Sq % 256 == 0:
        tq = 256
    elif Sq % 128 == 0:
        tq = 128
    else:
        tq = Sq
    nq = Sq // tq

    q = q.astype(jnp.bfloat16)
    k = k.astype(jnp.bfloat16)
    v = v.astype(jnp.bfloat16)

    q_spec = pl.BlockSpec((1, tq, hd), lambda bh, qi: (bh, qi, 0))
    kv_spec = pl.BlockSpec((1, Sk, hd), lambda bh, qi: (bh, 0, 0))
    out_spec = pl.BlockSpec((1, tq, hd), lambda bh, qi: (bh, qi, 0))
    out_shape = jax.ShapeDtypeStruct((BH, Sq, hd), jnp.bfloat16)
    cparams = pltpu.CompilerParams(dimension_semantics=("parallel", "parallel"))

    if mask is None:
        return pl.pallas_call(
            functools.partial(_attn_kernel, scale=scale),
            grid=(BH, nq),
            in_specs=[q_spec, kv_spec, kv_spec],
            out_specs=out_spec, out_shape=out_shape, compiler_params=cparams,
        )(q, k, v)

    mask_f = mask.astype(jnp.float32)
    mask_spec = pl.BlockSpec((1, Sk), lambda bh, qi: (bh // num_heads, 0))
    return pl.pallas_call(
        functools.partial(_attn_mask_kernel, scale=scale),
        grid=(BH, nq),
        in_specs=[mask_spec, q_spec, kv_spec, kv_spec],
        out_specs=out_spec, out_shape=out_shape, compiler_params=cparams,
    )(mask_f, q, k, v)


# ----------------------------------------------------------------------------
# Transformer building blocks
# ----------------------------------------------------------------------------

def mha_self(x, p, num_heads, mask=None):
    """Self-attention with fused QKV projection.  x: (B, S, D) -> (B*S, D)."""
    B, S, D = x.shape
    hd = D // num_heads
    qkv = linear(x.reshape(B * S, D), p['qkv']['w'], p['qkv']['b'])    # (B*S, 3D)
    qkv = qkv.reshape(B, S, 3, num_heads, hd)
    # TODO(synk): head split/merge transposes stay in XLA glue; a fully
    # lane-dense (B,S,D) in-kernel head loop is left as future work.
    q = qkv[:, :, 0].transpose(0, 2, 1, 3).reshape(B * num_heads, S, hd)
    k = qkv[:, :, 1].transpose(0, 2, 1, 3).reshape(B * num_heads, S, hd)
    v = qkv[:, :, 2].transpose(0, 2, 1, 3).reshape(B * num_heads, S, hd)
    o = attention(q, k, v, mask, scale=hd ** -0.5, num_heads=num_heads)
    o = o.reshape(B, num_heads, S, hd).transpose(0, 2, 1, 3).reshape(B * S, D)
    return linear(o, p['o']['w'], p['o']['b'])


def mlp(p, x2d):
    """fc1 (+fused GELU) -> fc2.  x2d: (M, D)."""
    h = linear(x2d, p['fc1']['w'], p['fc1']['b'], activation="gelu")
    return linear(h, p['fc2']['w'], p['fc2']['b'])


def encoder_stack(layers, final_ln, x, num_heads, mask=None):
    """Pre-LN encoder; residual-add is fused with the next LayerNorm.
    Returns (final residual stream, final_ln(final residual stream))."""
    B, S, D = x.shape
    cur = x.reshape(B * S, D)
    ln = layernorm(cur, layers[0]['ln1'])
    n = len(layers)
    for idx, lp in enumerate(layers):
        h = mha_self(ln.reshape(B, S, D), lp['attn'], num_heads, mask)
        cur, ln2 = add_layernorm(cur, h, lp['ln2'])
        h2 = mlp(lp['mlp'], ln2)
        nxt = layers[idx + 1]['ln1'] if idx + 1 < n else final_ln
        cur, ln = add_layernorm(cur, h2, nxt)
    return cur.reshape(B, S, D), ln.reshape(B, S, D)


def attention_pool_head(p, x, num_heads):
    """SigLIP MultiheadAttentionPoolingHead: learned probe attends over tokens."""
    B, S, D = x.shape
    hd = D // num_heads
    probe = jnp.broadcast_to(p['probe'], (B, 1, D)).astype(jnp.bfloat16)
    q = linear(probe.reshape(B, D), p['attn']['q']['w'], p['attn']['q']['b'])  # (B, D)
    kv = linear(x.reshape(B * S, D), p['attn']['kv']['w'], p['attn']['kv']['b'])
    kv = kv.reshape(B, S, 2, num_heads, hd)
    k = kv[:, :, 0].transpose(0, 2, 1, 3).reshape(B * num_heads, S, hd)
    v = kv[:, :, 1].transpose(0, 2, 1, 3).reshape(B * num_heads, S, hd)
    qh = q.reshape(B, 1, num_heads, hd).transpose(0, 2, 1, 3).reshape(B * num_heads, 1, hd)
    o = attention(qh, k, v, None, scale=hd ** -0.5, num_heads=num_heads)   # (BH, 1, hd)
    o = o.reshape(B, num_heads, 1, hd).transpose(0, 2, 1, 3).reshape(B, D)
    h = linear(o, p['attn']['o']['w'], p['attn']['o']['b'])                # (B, D)
    residual = h.astype(jnp.float32)
    h_ln = layernorm(h, p['ln'])
    out = residual + mlp(p['mlp'], h_ln).astype(jnp.float32)
    return out                                                             # (B, D) f32


def vision_forward(params, cfg, pixel_values):
    """SiglipVisionModel-style tower.  pixel_values: (B, C, H, W) NCHW."""
    B, C, H, W = pixel_values.shape
    P = cfg['patch']
    D = cfg['hidden']
    # im2col patch extraction (glue); the conv is the Pallas tiled matmul.
    x = pixel_values.reshape(B, C, H // P, P, W // P, P)
    x = x.transpose(0, 2, 4, 1, 3, 5).reshape(B * (H // P) * (W // P), C * P * P)
    nP = (H // P) * (W // P)
    x = linear(x, params['patch']['w'], params['patch']['b']).reshape(B, nP, D)
    x = x + params['pos_emb'][None].astype(jnp.bfloat16)
    _, last_hidden = encoder_stack(params['layers'], params['post_ln'],
                                   x, cfg['heads'])
    pooled = attention_pool_head(params['head'], last_hidden, cfg['heads'])
    return last_hidden, pooled


def text_forward(params, cfg, input_ids, attention_mask=None):
    """SiglipTextModel-style tower.  input_ids: (B, S) int32."""
    B, S = input_ids.shape
    D = cfg['hidden']
    x = jnp.take(params['tok_emb'], input_ids, axis=0) + params['pos_emb'][None, :S]
    x = x.astype(jnp.bfloat16)
    _, last_hidden = encoder_stack(params['layers'], params['final_ln'],
                                   x, cfg['heads'], attention_mask)
    pooled = last_hidden[:, -1]                      # SigLIP text pooling: last token
    pooled = linear(pooled, params['head']['w'], params['head']['b'],
                    out_dtype=jnp.float32)
    return pooled


# ----------------------------------------------------------------------------
# DaSiglipModel forward
# ----------------------------------------------------------------------------

def dasiglip_forward(params, image_pixel_values=None, text_dict=None):
    out = {}
    if image_pixel_values is not None:
        # encode_image(control=True, normalize=True)
        _, controller_pooled = vision_forward(
            params['visual_control'], params['ctrl_cfg'], image_pixel_values)
        f_degrad = controller_pooled                 # degradation_feature_head = Identity
        degradation_logits = linear(
            f_degrad, params['deg_logit_head']['w'], params['deg_logit_head']['b'],
            out_dtype=jnp.float32)
        # base (frozen) visual tower
        _, image_content_features = vision_forward(
            params['siglip_visual'], params['vis_cfg'], image_pixel_values)
        out['image_content_features'] = l2norm(image_content_features)
        out['image_degradation_features'] = l2norm(f_degrad)
        out['degradation_logits'] = degradation_logits
    else:
        out['image_content_features'] = None
        out['image_degradation_features'] = None
        out['degradation_logits'] = None

    if text_dict is not None:
        caption_tokens = text_dict.get('caption_tokens')
        caption_attention_mask = text_dict.get('caption_attention_mask')
        degradation_target = text_dict.get('degradation_target')
        true_deg_tokens = text_dict.get('true_degradation_text_tokens')
        true_deg_mask = text_dict.get('true_degradation_text_attention_mask')
        if caption_tokens is not None:
            tf = text_forward(params['siglip_text'], params['txt_cfg'],
                              caption_tokens, caption_attention_mask)
            out['text_content_features'] = l2norm(tf)
        else:
            out['text_content_features'] = None
        out['degradation_target'] = degradation_target if degradation_target is not None else None
        if true_deg_tokens is not None:
            tdf = text_forward(params['siglip_text'], params['txt_cfg'],
                               true_deg_tokens, true_deg_mask)
            out['text_degradation_features'] = l2norm(tdf)
        else:
            out['text_degradation_features'] = None
    else:
        out['text_content_features'] = None
        out['degradation_target'] = None
        out['text_degradation_features'] = None

    out['logit_scale'] = jnp.exp(params['logit_scale'])
    return out


# ----------------------------------------------------------------------------
# Deterministic parameter initialization (synthetic, shapes follow the module)
# ----------------------------------------------------------------------------

class _Rng:
    def __init__(self, seed):
        self._key = jax.random.PRNGKey(seed)

    def next(self):
        self._key, k = jax.random.split(self._key)
        return k


def _init_dense(rng, din, dout, scale=0.02):
    # Weights stored pre-cast to bf16 (MXU dtype); bias kept in f32 (fused in
    # the f32 epilogue of the matmul kernel).
    w = scale * jax.random.normal(rng.next(), (din, dout), jnp.float32)
    b = scale * jax.random.normal(rng.next(), (dout,), jnp.float32)
    return {'w': w.astype(jnp.bfloat16), 'b': b}


def _init_ln(d):
    return {'g': jnp.ones((1, d), jnp.float32), 'b': jnp.zeros((1, d), jnp.float32)}


def _init_layer(rng, d, mlp_d):
    return {
        'ln1': _init_ln(d),
        'attn': {'qkv': _init_dense(rng, d, 3 * d), 'o': _init_dense(rng, d, d)},
        'ln2': _init_ln(d),
        'mlp': {'fc1': _init_dense(rng, d, mlp_d), 'fc2': _init_dense(rng, mlp_d, d)},
    }


def _init_vision(rng, cfg):
    C, P, D, mlp_d = cfg['channels'], cfg['patch'], cfg['hidden'], cfg['mlp']
    n_patches = (cfg['image'] // P) ** 2
    return {
        'patch': _init_dense(rng, C * P * P, D),
        'pos_emb': 0.02 * jax.random.normal(rng.next(), (n_patches, D), jnp.float32),
        'layers': [_init_layer(rng, D, mlp_d) for _ in range(cfg['layers'])],
        'post_ln': _init_ln(D),
        'head': {
            'probe': 0.02 * jax.random.normal(rng.next(), (1, 1, D), jnp.float32),
            'attn': {'q': _init_dense(rng, D, D), 'kv': _init_dense(rng, D, 2 * D),
                     'o': _init_dense(rng, D, D)},
            'ln': _init_ln(D),
            'mlp': {'fc1': _init_dense(rng, D, mlp_d), 'fc2': _init_dense(rng, mlp_d, D)},
        },
    }


def _init_text(rng, cfg):
    D, mlp_d = cfg['hidden'], cfg['mlp']
    return {
        'tok_emb': 0.02 * jax.random.normal(rng.next(), (cfg['vocab'], D), jnp.float32),
        'pos_emb': 0.02 * jax.random.normal(rng.next(), (cfg['max_pos'], D), jnp.float32),
        'layers': [_init_layer(rng, D, mlp_d) for _ in range(cfg['layers'])],
        'final_ln': _init_ln(D),
        'head': _init_dense(rng, D, D),
    }


def init_dasiglip_params(seed=0, num_degradation_types=7,
                         controller_transformer_depth=1):
    rng = _Rng(seed)
    vis_cfg = dict(channels=3, image=16, patch=4, hidden=32, heads=4, layers=2, mlp=64)
    ctrl_cfg = dict(vis_cfg)
    ctrl_cfg['layers'] = controller_transformer_depth     # controller custom depth
    txt_cfg = dict(vocab=64, max_pos=8, hidden=32, heads=4, layers=2, mlp=64)
    params = {
        'vis_cfg': vis_cfg,
        'ctrl_cfg': ctrl_cfg,
        'txt_cfg': txt_cfg,
        'siglip_visual': _init_vision(rng, vis_cfg),
        'visual_control': _init_vision(rng, ctrl_cfg),
        'siglip_text': _init_text(rng, txt_cfg),
        'deg_logit_head': _init_dense(rng, vis_cfg['hidden'], num_degradation_types),
        # siglip_text has no logit_scale attr -> new Parameter log(1/0.07)
        'logit_scale': jnp.log(jnp.asarray(1.0 / 0.07, jnp.float32)),
    }
    return params


# ----------------------------------------------------------------------------
# Main
# ----------------------------------------------------------------------------

if __name__ == "__main__":
    params = init_dasiglip_params(seed=0, num_degradation_types=7,
                                  controller_transformer_depth=1)

    key = jax.random.PRNGKey(0)
    k_img, k_cap, k_tgt, k_deg = jax.random.split(key, 4)

    B = 2
    # layout: NCHW image input (PyTorch convention)
    image_pixel_values = jax.random.normal(k_img, (B, 3, 16, 16), jnp.float32)
    caption_tokens = jax.random.randint(k_cap, (B, 8), 0, params['txt_cfg']['vocab'],
                                        dtype=jnp.int32)
    caption_attention_mask = jnp.ones((B, 8), jnp.int32)
    degradation_target = jax.random.randint(k_tgt, (B,), 0, 7, dtype=jnp.int32)
    true_degradation_text_tokens = jax.random.randint(
        k_deg, (B, 8), 0, params['txt_cfg']['vocab'], dtype=jnp.int32)
    true_degradation_text_mask = jnp.ones((B, 8), jnp.int32)

    text_dict = {
        'caption_tokens': caption_tokens,
        'caption_attention_mask': caption_attention_mask,
        'degradation_target': degradation_target,
        'true_degradation_text_tokens': true_degradation_text_tokens,
        'true_degradation_text_attention_mask': true_degradation_text_mask,
    }

    out = dasiglip_forward(params, image_pixel_values=image_pixel_values,
                           text_dict=text_dict)

    for k, v in out.items():
        if v is not None:
            jax.block_until_ready(v)

    # basic sanity on shapes
    assert out['image_content_features'].shape == (B, 32)
    assert out['image_degradation_features'].shape == (B, 32)
    assert out['degradation_logits'].shape == (B, 7)
    assert out['text_content_features'].shape == (B, 32)
    assert out['text_degradation_features'].shape == (B, 32)
    assert out['logit_scale'].shape == ()

    print("KERNEL_OK")
</pallas_src>

<mosaic_0001>
module attributes {stable_mosaic.version = 11 : i64} {
  func.func @_linear_kernel(%arg0: i32, %arg1: i32, %arg2: i32, %arg3: memref<32x128xbf16, #tpu.memory_space<vmem>>, %arg4: memref<128x128xbf16, #tpu.memory_space<vmem>>, %arg5: memref<1x128xf32, #tpu.memory_space<vmem>>, %arg6: memref<32x128xbf16, #tpu.memory_space<vmem>>, %arg7: memref<32x128xf32, #tpu.memory_space<vmem>>) attributes {dimension_semantics = [#tpu.dimension_semantics<parallel>, #tpu.dimension_semantics<parallel>, #tpu.dimension_semantics<arbitrary>], iteration_bounds = array<i64: 1, 1, 1>, scalar_prefetch = 0 : i64, scratch_operands = 1 : i64, tpu.core_type = #tpu.core_type<tc>, window_params = [{transform_indices = @transform_0, window_bounds = array<i64: 32, 128>}, {transform_indices = @transform_1, window_bounds = array<i64: 128, 128>}, {transform_indices = @transform_2, window_bounds = array<i64: 1, 128>}, {transform_indices = @transform_3, window_bounds = array<i64: 32, 128>}]} {
    %c0_i32 = arith.constant 0 : i32
    %0 = arith.cmpi eq, %arg2, %c0_i32 : i32
    %1 = arith.extui %0 : i1 to i32
    %c0_i32_0 = arith.constant 0 : i32
    %2 = arith.cmpi ne, %1, %c0_i32_0 : i32
    scf.if %2 {
      %cst_10 = arith.constant 0.000000e+00 : f32
      %12 = vector.broadcast %cst_10 : f32 to vector<32x128xf32>
      %c0_11 = arith.constant 0 : index
      %c0_12 = arith.constant 0 : index
      %13 = vector.load %arg7[%c0_11, %c0_12] : memref<32x128xf32, #tpu.memory_space<vmem>>, vector<32x128xf32>
      tpu.vector_store %arg7[%c0_11, %c0_12], %12 {strides = array<i32>} : memref<32x128xf32, #tpu.memory_space<vmem>>, vector<32x128xf32>,
    } else {
    }
    %c0 = arith.constant 0 : index
    %c0_1 = arith.constant 0 : index
    %3 = vector.load %arg7[%c0, %c0_1] : memref<32x128xf32, #tpu.memory_space<vmem>>, vector<32x128xf32>
    %c0_2 = arith.constant 0 : index
    %c0_3 = arith.constant 0 : index
    %4 = vector.load %arg3[%c0_2, %c0_3] : memref<32x128xbf16, #tpu.memory_space<vmem>>, vector<32x128xbf16>
    %c0_4 = arith.constant 0 : index
    %c0_5 = arith.constant 0 : index
    %5 = vector.load %arg4[%c0_4, %c0_5] : memref<128x128xbf16, #tpu.memory_space<vmem>>, vector<128x128xbf16>
    %cst = arith.constant dense<0.000000e+00> : vector<32x128xf32>
    %6 = tpu.matmul %4, %5, %cst {dimension_numbers = #tpu.dot_dimension_numbers<[1], [0], [0], [1], [0, 0, 1, 1], [], []>} : vector<32x128xbf16>, vector<128x128xbf16>, vector<32x128xf32> -> vector<32x128xf32>
    %7 = arith.addf %3, %6 : vector<32x128xf32>
    %c0_6 = arith.constant 0 : index
    %c0_7 = arith.constant 0 : index
    %8 = vector.load %arg7[%c0_6, %c0_7] : memref<32x128xf32, #tpu.memory_space<vmem>>, vector<32x128xf32>
    tpu.vector_store %arg7[%c0_6, %c0_7], %7 {strides = array<i32>} : memref<32x128xf32, #tpu.memory_space<vmem>>, vector<32x128xf32>,
    %c0_i32_8 = arith.constant 0 : i32
    %9 = arith.cmpi eq, %arg2, %c0_i32_8 : i32
    %10 = arith.extui %9 : i1 to i32
    %c0_i32_9 = arith.constant 0 : i32
    %11 = arith.cmpi ne, %10, %c0_i32_9 : i32
    scf.if %11 {
      %c0_10 = arith.constant 0 : index
      %c0_11 = arith.constant 0 : index
      %12 = vector.load %arg7[%c0_10, %c0_11] : memref<32x128xf32, #tpu.memory_space<vmem>>, vector<32x128xf32>
      %c0_12 = arith.constant 0 : index
      %c0_13 = arith.constant 0 : index
      %13 = vector.load %arg5[%c0_12, %c0_13] : memref<1x128xf32, #tpu.memory_space<vmem>>, vector<1x128xf32>
      %14 = vector.broadcast %13 : vector<1x128xf32> to vector<32x128xf32>
      %15 = arith.addf %12, %14 : vector<32x128xf32>
      %16 = arith.truncf %15 : vector<32x128xf32> to vector<32x128xbf16>
      %c0_14 = arith.constant 0 : index
      %c0_15 = arith.constant 0 : index
      %17 = vector.load %arg6[%c0_14, %c0_15] : memref<32x128xbf16, #tpu.memory_space<vmem>>, vector<32x128xbf16>
      tpu.vector_store %arg6[%c0_14, %c0_15], %16 {strides = array<i32>} : memref<32x128xbf16, #tpu.memory_space<vmem>>, vector<32x128xbf16>,
    } else {
    }
    return
  }
  func.func @transform_0(%arg0: i32, %arg1: i32, %arg2: i32) -> (i32, i32) {
    %c0_i32 = arith.constant 0 : i32
    return %arg0, %arg2 : i32, i32
  }
  func.func @transform_1(%arg0: i32, %arg1: i32, %arg2: i32) -> (i32, i32) {
    %c0_i32 = arith.constant 0 : i32
    return %arg2, %arg1 : i32, i32
  }
  func.func @transform_2(%arg0: i32, %arg1: i32, %arg2: i32) -> (i32, i32) {
    %c0_i32 = arith.constant 0 : i32
    %c0_i32_0 = arith.constant 0 : i32
    return %c0_i32, %arg1 : i32, i32
  }
  func.func @transform_3(%arg0: i32, %arg1: i32, %arg2: i32) -> (i32, i32) {
    %c0_i32 = arith.constant 0 : i32
    return %arg0, %arg1 : i32, i32
  }
}

</mosaic_0001>

<llo_original>
// kernel: tpu_custom_call.1
$region0: #{tpu_custom_call.1}
  #allocation0 [shape = 'u32[]', space=smem, size = 0x4, offset = 0x4, fixed_abs, tag = 'smem constant byte address 0x4 - core index']
  #allocation1 [shape = 'u32[72,128]{1,0:T(1,128)}', space=vmem, size = 0x9000, scoped, tag = 'internal scratch']
  #allocation2 [shape = 'f32[32,128]{1,0:T(8,128)}', space=vmem, size = 0x4000, scoped, tag = 'scratch operand']
  %s0 = inlined_call_operand.hbm [shape: bf16[32,128], index: 0, kind: input, shape index: {}]
  %s1 = inlined_call_operand.hbm [shape: bf16[128,128], index: 1, kind: input, shape index: {}]
  %s2 = inlined_call_operand.vmem [shape: f32[1,128], index: 2, kind: input, shape index: {}]
  %s3 = inlined_call_operand.hbm [shape: bf16[32,128], index: 3, kind: output, shape index: {}]
  %s4 = sld [smem:[#allocation0]]
  $region38: #{tpu_custom_call.1} parent=0
    _
  %s6 = ssub.s32 1, %s4
  %s7 = scalar_select 0, %s6, %s4
  $region1: #{tpu_custom_call.1} parent=0
    #allocation3 [shape = 'u8[8192]{0}', space=vmem, size = 0x2000, scoped, tag = 'input window, operand 0, single buffered']
    #allocation4 [shape = 's32[1]{0}', space=sflag, size = 0x4, scoped, tag = 'scoped memory for tpu_custom_call.1']
    #allocation5 [shape = 's32[1]{0}', space=sflag, size = 0x4, scoped, tag = 'scoped memory for tpu_custom_call.1']
    #allocation6 [shape = 'u8[32768]{0}', space=vmem, size = 0x8000, scoped, tag = 'input window, operand 1, single buffered']
    #allocation7 [shape = 's32[1]{0}', space=sflag, size = 0x4, scoped, tag = 'scoped memory for tpu_custom_call.1']
    #allocation8 [shape = 'u8[8192]{0}', space=vmem, size = 0x2000, scoped, tag = 'output window, operand 0, single buffered']
    %8 = vsyncpa [#allocation4], 0
    %9 = vsyncpa [#allocation7], 0
    %10 = vsyncpa [#allocation5], 0
    // Predicated region
    $region2: #{tpu_custom_call.1} parent=1 // pred_check
      _
    $region3: #{tpu_custom_call.1} parent=1 // pred_check_branch
      %12 = sbr.rel (0) target = $region5
    $region4: #{tpu_custom_call.1} parent=1 // pred_region
      %14 = vsyncadd [#allocation4], 0
      %s15 = sshll.u32 %s0, 4
      %s16 = int_to_ptr.hbm [resolvable:$true] %s15
      %s17 = sshll.u32 [#allocation3], 4
      %s18 = int_to_ptr.vmem [resolvable:$true] %s17
      %23 = dma.hbm_to_vmem [thread:$0]  %s16, 256, %s18, [#allocation4], 64, 64, 4
    $region5: #{tpu_custom_call.1} parent=1 // pred_fallthru
      _
    // Predicated region
    $region6: #{tpu_custom_call.1} parent=1 // pred_check
      _
    $region7: #{tpu_custom_call.1} parent=1 // pred_check_branch
      %25 = sbr.rel (0) target = $region9
    $region8: #{tpu_custom_call.1} parent=1 // pred_region
      %27 = vsyncadd [#allocation7], 0
      %s28 = sshll.u32 %s1, 4
      %s29 = int_to_ptr.hbm [resolvable:$true] %s28
      %s30 = sshll.u32 [#allocation6], 4
      %s31 = int_to_ptr.vmem [resolvable:$true] %s30
      %36 = dma.hbm_to_vmem [thread:$0]  %s29, 1024, %s31, [#allocation7], 64, 64, 4
    $region9: #{tpu_custom_call.1} parent=1 // pred_fallthru
      _
    // Predicated region
    $region10: #{tpu_custom_call.1} parent=1 // pred_check
      _
    $region11: #{tpu_custom_call.1} parent=1 // pred_check_branch
      %38 = sbr.rel (0) target = $region13
    $region12: #{tpu_custom_call.1} parent=1 // pred_region
      _
    $region13: #{tpu_custom_call.1} parent=1 // pred_fallthru
      _
    // Predicated region
    $region14: #{tpu_custom_call.1} parent=1 // pred_check
      _
    $region15: #{tpu_custom_call.1} parent=1 // pred_check_branch
      %40 = sbr.rel (0) target = $region17
    $region16: #{tpu_custom_call.1} parent=1 // pred_region
      %42 = dma.done [#allocation4], 256
    $region17: #{tpu_custom_call.1} parent=1 // pred_fallthru
      _
    // Predicated region
    $region18: #{tpu_custom_call.1} parent=1 // pred_check
      _
    $region19: #{tpu_custom_call.1} parent=1 // pred_check_branch
      %44 = sbr.rel (0) target = $region21
    $region20: #{tpu_custom_call.1} parent=1 // pred_region
      %46 = dma.done [#allocation7], 1024
    $region21: #{tpu_custom_call.1} parent=1 // pred_fallthru
      _
    %p47 = scmp.eq.s32.totalorder 0, 0
    // Predicated region
    $region22: #{tpu_custom_call.1} parent=1 // pred_check
      %p48 = pneg %p47
    $region23: #{tpu_custom_call.1} parent=1 // pred_check_branch
      %50 = sbr.rel (%p48) target = $region25
    $region24: #{tpu_custom_call.1} parent=1 // pred_region
      %51 = vst [vmem:[#allocation2] sm:$0xff] 0.0
      %52 = vst [vmem:[#allocation2 + $0x8] sm:$0xff] 0.0
      %53 = vst [vmem:[#allocation2 + $0x10] sm:$0xff] 0.0
      %54 = vst [vmem:[#allocation2 + $0x18] sm:$0xff] 0.0
    $region25: #{tpu_custom_call.1} parent=1 // pred_fallthru
      _
    %v55 = vld [vmem:[#allocation2] sm:$0xff]
    %v56 = vld [vmem:[#allocation2 + $0x8] sm:$0xff]
    %v57 = vld [vmem:[#allocation2 + $0x10] sm:$0xff]
    %v58 = vld [vmem:[#allocation2 + $0x18] sm:$0xff]
    %v59 = vld [vmem:[#allocation3] sm:$0xf]
    %v60 = vld [vmem:[#allocation3 + $0x4] sm:$0xf]
    %v61 = vld [vmem:[#allocation3 + $0x8] sm:$0xf]
    %v62 = vld [vmem:[#allocation3 + $0xc] sm:$0xf]
    %v63 = vld [vmem:[#allocation6] sm:$0xf]
    %v64 = vld [vmem:[#allocation6 + $0x4] sm:$0xf]
    %v65 = vld [vmem:[#allocation6 + $0x8] sm:$0xf]
    %v66 = vld [vmem:[#allocation6 + $0xc] sm:$0xf]
    %v67 = vld [vmem:[#allocation6 + $0x10] sm:$0xf]
    %v68 = vld [vmem:[#allocation6 + $0x14] sm:$0xf]
    %v69 = vld [vmem:[#allocation6 + $0x18] sm:$0xf]
    %v70 = vld [vmem:[#allocation6 + $0x1c] sm:$0xf]
    %v71 = vld [vmem:[#allocation6 + $0x20] sm:$0xf]
    %v72 = vld [vmem:[#allocation6 + $0x24] sm:$0xf]
    %v73 = vld [vmem:[#allocation6 + $0x28] sm:$0xf]
    %v74 = vld [vmem:[#allocation6 + $0x2c] sm:$0xf]
    %v75 = vld [vmem:[#allocation6 + $0x30] sm:$0xf]
    %v76 = vld [vmem:[#allocation6 + $0x34] sm:$0xf]
    %v77 = vld [vmem:[#allocation6 + $0x38] sm:$0xf]
    %v78 = vld [vmem:[#allocation6 + $0x3c] sm:$0xf]
    %v83 = vunpack.c.l.b16 %v59
    %v84 = vunpack.c.l.b16 %v60
    %v85 = vunpack.c.l.b16 %v61
    %v86 = vunpack.c.l.b16 %v62
    %v87 = vpack.c.b16 %v84, %v83
    %v88 = vpack.c.b16 %v86, %v85
    %v107 = vunpack.c.l.b16 %v63
    %v108 = vunpack.c.l.b16 %v64
    %v109 = vunpack.c.l.b16 %v65
    %v110 = vunpack.c.l.b16 %v66
    %v111 = vunpack.c.l.b16 %v67
    %v112 = vunpack.c.l.b16 %v68
    %v113 = vunpack.c.l.b16 %v69
    %v114 = vunpack.c.l.b16 %v70
    %v115 = vunpack.c.l.b16 %v71
    %v116 = vunpack.c.l.b16 %v72
    %v117 = vunpack.c.l.b16 %v73
    %v118 = vunpack.c.l.b16 %v74
    %v119 = vunpack.c.l.b16 %v75
    %v120 = vunpack.c.l.b16 %v76
    %v121 = vunpack.c.l.b16 %v77
    %v122 = vunpack.c.l.b16 %v78
    %v123 = vpack.c.b16 %v108, %v107
    %v124 = vpack.c.b16 %v110, %v109
    %v125 = vpack.c.b16 %v112, %v111
    %v126 = vpack.c.b16 %v114, %v113
    %v127 = vpack.c.b16 %v116, %v115
    %v128 = vpack.c.b16 %v118, %v117
    %v129 = vpack.c.b16 %v120, %v119
    %v130 = vpack.c.b16 %v122, %v121
    %139 = vmatpush.bf16.msra.mxu0 %v130
    %140 = vmatpush.bf16.msra.mxu0 %v129
    %141 = vmatpush.bf16.msra.mxu0 %v128
    %142 = vmatpush.bf16.msra.mxu0 %v127
    %143 = vmatpush.bf16.msra.mxu0 %v126
    %144 = vmatpush.bf16.msra.mxu0 %v125
    %145 = vmatpush.bf16.msra.mxu0 %v124
    %146 = vmatpush.bf16.msra.mxu0 %v123
    %147 = vmatmul.bf16.gmra.mxu0 %v87
    %v148 = vpop.f32.mrf.mxu0
    %v149 = vadd.f32 0.0, %v148
    %v150 = vpop.f32.mrf.mxu0
    %v151 = vadd.f32 0.0, %v150
    %152 = vmatmul.bf16.gmra.mxu0 %v88
    %v153 = vpop.f32.mrf.mxu0
    %v154 = vadd.f32 0.0, %v153
    %v155 = vpop.f32.mrf.mxu0
    %v156 = vadd.f32 0.0, %v155
    %157 = vdwg.mxu0
    %v158 = vadd.f32 %v55, %v149
    %v159 = vadd.f32 %v56, %v151
    %v160 = vadd.f32 %v57, %v154
    %v161 = vadd.f32 %v58, %v156
    %162 = vst [vmem:[#allocation2] sm:$0xff] %v158
    %163 = vst [vmem:[#allocation2 + $0x8] sm:$0xff] %v159
    %164 = vst [vmem:[#allocation2 + $0x10] sm:$0xff] %v160
    %165 = vst [vmem:[#allocation2 + $0x18] sm:$0xff] %v161
    // Predicated region
    $region26: #{tpu_custom_call.1} parent=1 // pred_check
      %p166 = pneg %p47
    $region27: #{tpu_custom_call.1} parent=1 // pred_check_branch
      %168 = sbr.rel (%p166) target = $region29
    $region28: #{tpu_custom_call.1} parent=1 // pred_region
      %v169 = vld [vmem:[#allocation2] sm:$0xff]
      %v170 = vld [vmem:[#allocation2 + $0x8] sm:$0xff]
      %v171 = vld [vmem:[#allocation2 + $0x10] sm:$0xff]
      %v172 = vld [vmem:[#allocation2 + $0x18] sm:$0xff]
      %v173 = vld [vmem:[%s2] sm:$0x1]
      %v175 = vperm.slane %v173, 0
      %v177 = vadd.f32 %v169, %v175
      %v178 = vadd.f32 %v170, %v175
      %v179 = vadd.f32 %v171, %v175
      %v180 = vadd.f32 %v172, %v175
      %v181 = vpack.c.bf16 %v177, %v177
      %v182 = vpack.c.bf16 %v178, %v178
      %v183 = vpack.c.bf16 %v179, %v179
      %v184 = vpack.c.bf16 %v180, %v180
      %185 = vst [vmem:[#allocation8] sm:$0xf] %v181
      %186 = vst [vmem:[#allocation8 + $0x4] sm:$0xf] %v182
      %187 = vst [vmem:[#allocation8 + $0x8] sm:$0xf] %v183
      %188 = vst [vmem:[#allocation8 + $0xc] sm:$0xf] %v184
    $region29: #{tpu_custom_call.1} parent=1 // pred_fallthru
      _
    // Predicated region
    $region30: #{tpu_custom_call.1} parent=1 // pred_check
      _
    $region31: #{tpu_custom_call.1} parent=1 // pred_check_branch
      %190 = sbr.rel (0) target = $region33
    $region32: #{tpu_custom_call.1} parent=1 // pred_region
      %192 = vsyncadd [#allocation5], 0
      %s193 = sshll.u32 [#allocation8], 4
      %s194 = int_to_ptr.vmem [resolvable:$true] %s193
      %s195 = sshll.u32 %s3, 4
      %s196 = int_to_ptr.hbm [resolvable:$true] %s195
      %201 = dma.vmem_to_hbm [thread:$0]  %s194, 256, %s196, [#allocation5], 64, 64, 4
    $region33: #{tpu_custom_call.1} parent=1 // pred_fallthru
      _
    // Predicated region
    $region34: #{tpu_custom_call.1} parent=1 // pred_check
      _
    $region35: #{tpu_custom_call.1} parent=1 // pred_check_branch
      %203 = sbr.rel (0) target = $region37
    $region36: #{tpu_custom_call.1} parent=1 // pred_region
      %205 = dma.done [#allocation5], 256
    $region37: #{tpu_custom_call.1} parent=1 // pred_fallthru
      _
    %206 = vsyncpa [#allocation4], 1
    %207 = vsyncpa [#allocation7], 1
    %208 = vsyncpa [#allocation5], 1

</llo_original>
